<compile_context>
chip_gen: v5e
topology: v5e:2x2
jax: 0.10.0
libtpu: 0.0.40
codegen_flags: <defaults>
</compile_context>

<pallas_src>
import functools

import numpy as np
import jax
import jax.numpy as jnp
from jax.experimental import pallas as pl
from jax.experimental.pallas import tpu as pltpu

_NEG_INF = float("-inf")


# --------------------------------------------------------------------------
# Small helpers
# --------------------------------------------------------------------------
def _cdiv(a, b):
    return -(-a // b)


def _round_up(x, m):
    return ((x + m - 1) // m) * m


def _sublane_granule(itemsize):
    # packed-sublane granule: f32/i32 -> 8, bf16/f16 -> 16, int8/fp8 -> 32
    return {4: 8, 2: 16, 1: 32}.get(int(itemsize), 8)


def _pick_budget():
    """Per-input-block byte budget; bigger blocks on high-bandwidth chips."""
    try:
        kind = jax.devices()[0].device_kind.lower()
    except Exception:
        return 4 << 20
    if any(t in kind for t in ("v6", "v7", "trillium")):
        return 6 << 20
    return 4 << 20


def _vmem_limit(working_set_bytes):
    # 2x input block + 2x padded output block + scratch, with headroom.
    need = int(working_set_bytes * 1.25) + (2 << 20)
    return int(min(max(need, 16 << 20), 40 << 20))


# --------------------------------------------------------------------------
# Single-K-tile kernels (whole reduction axis in one block; no accumulators)
# --------------------------------------------------------------------------
def _lse_mid_single_kernel(x_ref, o_ref):
    x = x_ref[...].astype(jnp.float32)                     # (TM1, K, TM2)
    m = jnp.max(x, axis=1, keepdims=True)                  # (TM1, 1, TM2)
    m0 = jnp.where(jnp.isfinite(m), m, jnp.zeros_like(m))
    s = jnp.sum(jnp.exp(x - m0), axis=1)                   # (TM1, TM2)
    o_ref[...] = (jnp.log(s) + m0[:, 0, :]).astype(o_ref.dtype)


def _lse_last_single_kernel(x_ref, o_ref):
    x = x_ref[...].astype(jnp.float32)                     # (TM, K)
    m = jnp.max(x, axis=-1, keepdims=True)                 # (TM, 1)
    m0 = jnp.where(jnp.isfinite(m), m, jnp.zeros_like(m))
    s = jnp.sum(jnp.exp(x - m0), axis=-1, keepdims=True)
    o_ref[...] = (jnp.log(s) + m0).astype(o_ref.dtype)


# --------------------------------------------------------------------------
# Multi-K-tile kernels (online flash-style (max, sum) accumulation)
# --------------------------------------------------------------------------
def _lse_mid_kernel(x_ref, o_ref, m_ref, s_ref, *, k_total, tk):
    """logsumexp over the middle (sublane) axis of (TM1, TK, TM2) blocks.

    Accumulators are flat (TM1, TM2) f32 (lane-dense, no padded singleton
    dim).  The partial-K mask is only applied on the last K block.
    """
    k = pl.program_id(2)
    k_last = pl.num_programs(2) - 1

    @pl.when(k == 0)
    def _():
        m_ref[...] = jnp.full(m_ref.shape, _NEG_INF, jnp.float32)
        s_ref[...] = jnp.zeros(s_ref.shape, jnp.float32)

    def update(x):
        b_max = jnp.max(x, axis=1)                         # (TM1, TM2)
        m_prev = m_ref[...]
        m_new = jnp.maximum(m_prev, b_max)
        # Guard against all -inf / +inf rows (exp(-inf - -inf) would be nan).
        m_safe = jnp.where(jnp.isfinite(m_new), m_new, jnp.zeros_like(m_new))
        alpha = jnp.exp(m_prev - m_safe)
        p = jnp.exp(x - m_safe[:, None, :])
        s_ref[...] = alpha * s_ref[...] + jnp.sum(p, axis=1)
        m_ref[...] = m_new

    x = x_ref[...].astype(jnp.float32)                     # (TM1, TK, TM2)
    if k_total % tk != 0:
        @pl.when(k != k_last)
        def _():
            update(x)

        @pl.when(k == k_last)
        def _():
            kidx = jax.lax.broadcasted_iota(jnp.int32, x.shape, 1)
            valid = (k * tk + kidx) < k_total
            update(jnp.where(valid, x, _NEG_INF))
    else:
        update(x)

    @pl.when(k == k_last)
    def _():
        m = m_ref[...]
        m0 = jnp.where(jnp.isfinite(m), m, jnp.zeros_like(m))
        o_ref[...] = (jnp.log(s_ref[...]) + m0).astype(o_ref.dtype)


def _lse_last_kernel(x_ref, o_ref, m_ref, s_ref, *, k_total, tk):
    """logsumexp over the last (lane) axis of (TM, TK) blocks.

    Per-lane (TM, 128) running accumulators: K steps fold the TK/128 lane
    groups with pure elementwise ops; the single cross-lane (XLU) reduction
    happens only in the finalize step.  Requires tk % 128 == 0 (guaranteed
    by the tile chooser whenever this kernel is selected).
    """
    k = pl.program_id(1)
    k_last = pl.num_programs(1) - 1
    n_groups = tk // 128

    @pl.when(k == 0)
    def _():
        m_ref[...] = jnp.full(m_ref.shape, _NEG_INF, jnp.float32)
        s_ref[...] = jnp.zeros(s_ref.shape, jnp.float32)

    def update(x):
        groups = [x[:, g * 128:(g + 1) * 128] for g in range(n_groups)]
        blk_max = groups[0]
        for g in range(1, n_groups):
            blk_max = jnp.maximum(blk_max, groups[g])
        m_prev = m_ref[...]
        m_new = jnp.maximum(m_prev, blk_max)
        m_safe = jnp.where(jnp.isfinite(m_new), m_new, jnp.zeros_like(m_new))
        alpha = jnp.exp(m_prev - m_safe)
        s_acc = jnp.exp(groups[0] - m_safe)
        for g in range(1, n_groups):
            s_acc = s_acc + jnp.exp(groups[g] - m_safe)
        s_ref[...] = alpha * s_ref[...] + s_acc
        m_ref[...] = m_new

    x = x_ref[...].astype(jnp.float32)                     # (TM, TK)
    if k_total % tk != 0:
        @pl.when(k != k_last)
        def _():
            update(x)

        @pl.when(k == k_last)
        def _():
            kidx = jax.lax.broadcasted_iota(jnp.int32, x.shape, 1)
            valid = (k * tk + kidx) < k_total
            update(jnp.where(valid, x, _NEG_INF))
    else:
        update(x)

    @pl.when(k == k_last)
    def _():
        m = m_ref[...]                                     # (TM, 128)
        row_max = jnp.max(m, axis=-1, keepdims=True)       # (TM, 1)
        row_max0 = jnp.where(jnp.isfinite(row_max), row_max,
                             jnp.zeros_like(row_max))
        total = jnp.sum(s_ref[...] * jnp.exp(m - row_max0),
                        axis=-1, keepdims=True)
        o_ref[...] = (jnp.log(total) + row_max0).astype(o_ref.dtype)


# --------------------------------------------------------------------------
# Tile-size heuristics
# --------------------------------------------------------------------------
def _choose_tiles_mid(M1, K, M2, itemsize, budget):
    sub = _sublane_granule(itemsize)
    # Lane dim (kept): full M2 if small, else a multiple of 128.
    TM2 = M2 if M2 <= 128 else min((M2 // 128) * 128, 2048)
    # Leading kept dim: keep small (it multiplies input & output blocks);
    # must be a multiple of 8 or full M1 (2-D output sublane constraint).
    TM1 = M1 if M1 <= 8 else 8
    # Reduction (sublane) dim takes the bulk of the budget; dtype-granule aligned.
    max_k = max(budget // max(TM1 * TM2 * itemsize, 1), sub)
    if K <= max_k:
        TK = K
        # K fits in one tile -> grow TM1 with the leftover budget
        # (accounting for the 128-lane-padded f32 output rows).
        row_in = TK * TM2 * itemsize
        row_out = _round_up(TM2, 128) * 4
        max_m1 = max(budget // max(row_in + row_out, 1), 1)
        if M1 <= max_m1:
            TM1 = M1
        elif max_m1 >= 8:
            TM1 = (max_m1 // 8) * 8
    else:
        TK = max((max_k // sub) * sub, sub)
    return TM1, TK, TM2


def _choose_tiles_last(M, K, itemsize, budget):
    sub = _sublane_granule(itemsize)
    # Lane (reduction) dim: full K if small, else a 128-multiple capped at 4096
    # so rows keep a healthy share of the budget (balanced TM vs TK).
    TK = K if K <= 4096 else 4096
    # Sublane (row) dim: include the 128-lane-padded f32 output row and, when
    # K is tiled, the two (TM, 128) f32 accumulator rows.
    row_bytes = TK * itemsize + 128 * 4
    if K > TK:
        row_bytes += 2 * 128 * 4
    max_m = max(budget // row_bytes, 1)
    if M <= max_m:
        TM = M
    else:
        TM = max((max_m // sub) * sub, min(sub, M))
    return TM, TK


# --------------------------------------------------------------------------
# Wrapper
# --------------------------------------------------------------------------
def pallas_logsumexp(x, dim, keepdim=False, *, block_budget_bytes=None):
    """torch.logsumexp(input, dim, keepdim) as a Pallas TPU kernel."""
    x = jnp.asarray(x)
    ndim = x.ndim
    dim = dim % ndim
    shape = x.shape
    K = shape[dim]
    itemsize = jnp.dtype(x.dtype).itemsize
    # torch.logsumexp returns a floating tensor even for integer inputs.
    out_dtype = x.dtype if jnp.issubdtype(x.dtype, jnp.floating) else jnp.float32
    out_itemsize = jnp.dtype(out_dtype).itemsize

    kept_shape = tuple(s for i, s in enumerate(shape) if i != dim)
    keep_shape = tuple(1 if i == dim else s for i, s in enumerate(shape))

    budget = block_budget_bytes or _pick_budget()
    total = int(np.prod(shape, dtype=np.int64))
    n_out = int(np.prod(kept_shape, dtype=np.int64)) if kept_shape else 1
    cost = pl.CostEstimate(flops=5 * total, transcendentals=total,
                           bytes_accessed=total * itemsize + n_out * out_itemsize)

    if dim == ndim - 1:
        # ---------------- reduce the last (lane) axis: [M, K] ----------------
        M = n_out
        x2 = x.reshape(M, K)
        TM, TK = _choose_tiles_last(M, K, itemsize, budget)
        # v7x dual TensorCore: keep >=2 blocks on the parallel axis when there
        # is enough work to be worth splitting.
        if _cdiv(M, TM) == 1 and M >= 16 and total * itemsize >= (512 << 10):
            TM = max(((TM // 2) // 8) * 8, 8)
        nm, nk = _cdiv(M, TM), _cdiv(K, TK)
        out_blk = _round_up(TM, 8) * 128 * 4        # (TM, 1) pads to 128 lanes
        if nk == 1:
            working = 2 * TM * K * itemsize + 2 * out_blk
            out2 = pl.pallas_call(
                _lse_last_single_kernel,
                out_shape=jax.ShapeDtypeStruct((M, 1), out_dtype),
                grid_spec=pltpu.PrefetchScalarGridSpec(
                    num_scalar_prefetch=0, grid=(nm,),
                    in_specs=[pl.BlockSpec((TM, K), lambda i: (i, 0))],
                    out_specs=pl.BlockSpec((TM, 1), lambda i: (i, 0))),
                compiler_params=pltpu.CompilerParams(
                    dimension_semantics=("parallel",),
                    vmem_limit_bytes=_vmem_limit(working)),
                cost_estimate=cost,
            )(x2)
        else:
            scratch = 2 * _round_up(TM, 8) * 128 * 4
            working = 2 * TM * TK * itemsize + 2 * out_blk + scratch
            out2 = pl.pallas_call(
                functools.partial(_lse_last_kernel, k_total=K, tk=TK),
                out_shape=jax.ShapeDtypeStruct((M, 1), out_dtype),
                grid_spec=pltpu.PrefetchScalarGridSpec(
                    num_scalar_prefetch=0, grid=(nm, nk),
                    in_specs=[pl.BlockSpec((TM, TK), lambda i, k: (i, k))],
                    out_specs=pl.BlockSpec((TM, 1), lambda i, k: (i, 0)),
                    scratch_shapes=[pltpu.VMEM((TM, 128), jnp.float32),
                                    pltpu.VMEM((TM, 128), jnp.float32)]),
                compiler_params=pltpu.CompilerParams(
                    dimension_semantics=("parallel", "arbitrary"),
                    vmem_limit_bytes=_vmem_limit(working)),
                cost_estimate=cost,
            )(x2)
        out = out2.reshape(keep_shape if keepdim else kept_shape)
    else:
        # -------- reduce a middle axis: [M1, K, M2] (no HBM transpose) -------
        M1 = int(np.prod(shape[:dim], dtype=np.int64)) if dim > 0 else 1
        M2 = int(np.prod(shape[dim + 1:], dtype=np.int64))
        x3 = x.reshape(M1, K, M2)
        TM1, TK, TM2 = _choose_tiles_mid(M1, K, M2, itemsize, budget)
        if (_cdiv(M1, TM1) * _cdiv(M2, TM2) == 1
                and total * itemsize >= (512 << 10)):
            if M1 >= 16:
                TM1 = max(((TM1 // 2) // 8) * 8, 8)
            elif TM2 >= 256 and TM2 % 256 == 0:
                TM2 //= 2
        n1, n2, nk = _cdiv(M1, TM1), _cdiv(M2, TM2), _cdiv(K, TK)
        out_blk = _round_up(TM1, 8) * _round_up(TM2, 128) * 4
        if nk == 1:
            working = 2 * TM1 * K * TM2 * itemsize + 2 * out_blk
            out3 = pl.pallas_call(
                _lse_mid_single_kernel,
                out_shape=jax.ShapeDtypeStruct((M1, M2), out_dtype),
                grid_spec=pltpu.PrefetchScalarGridSpec(
                    num_scalar_prefetch=0, grid=(n1, n2),
                    in_specs=[pl.BlockSpec((TM1, K, TM2),
                                           lambda i, j: (i, 0, j))],
                    out_specs=pl.BlockSpec((TM1, TM2), lambda i, j: (i, j))),
                compiler_params=pltpu.CompilerParams(
                    dimension_semantics=("parallel", "parallel"),
                    vmem_limit_bytes=_vmem_limit(working)),
                cost_estimate=cost,
            )(x3)
        else:
            working = 2 * TM1 * TK * TM2 * itemsize + 4 * out_blk  # + scratch
            out3 = pl.pallas_call(
                functools.partial(_lse_mid_kernel, k_total=K, tk=TK),
                out_shape=jax.ShapeDtypeStruct((M1, M2), out_dtype),
                grid_spec=pltpu.PrefetchScalarGridSpec(
                    num_scalar_prefetch=0, grid=(n1, n2, nk),
                    in_specs=[pl.BlockSpec((TM1, TK, TM2),
                                           lambda i, j, k: (i, k, j))],
                    out_specs=pl.BlockSpec((TM1, TM2), lambda i, j, k: (i, j)),
                    scratch_shapes=[pltpu.VMEM((TM1, TM2), jnp.float32),
                                    pltpu.VMEM((TM1, TM2), jnp.float32)]),
                compiler_params=pltpu.CompilerParams(
                    dimension_semantics=("parallel", "parallel", "arbitrary"),
                    vmem_limit_bytes=_vmem_limit(working)),
                cost_estimate=cost,
            )(x3)
        out = out3.reshape(keep_shape if keepdim else kept_shape)
    return out


# --------------------------------------------------------------------------
# Self-test
# --------------------------------------------------------------------------
if __name__ == "__main__":
    key = jax.random.PRNGKey(0)
    k1, k2, k3 = jax.random.split(key, 3)

    # Primary config from the PyTorch test: (2, 4, 16, 16), dim=1, keepdim=False.
    x = jax.random.normal(k1, (2, 4, 16, 16), dtype=jnp.float32)
    out = jax.block_until_ready(pallas_logsumexp(x, dim=1, keepdim=False))
    ref = jax.scipy.special.logsumexp(x, axis=1, keepdims=False)
    assert out.shape == ref.shape, (out.shape, ref.shape)
    np.testing.assert_allclose(np.asarray(out), np.asarray(ref),
                               rtol=1e-5, atol=1e-5)

    # Last-axis path, keepdim=True.
    out2 = jax.block_until_ready(pallas_logsumexp(x, dim=-1, keepdim=True))
    ref2 = jax.scipy.special.logsumexp(x, axis=-1, keepdims=True)
    assert out2.shape == ref2.shape, (out2.shape, ref2.shape)
    np.testing.assert_allclose(np.asarray(out2), np.asarray(ref2),
                               rtol=1e-5, atol=1e-5)

    # Middle-axis online-accumulation path (tiled K with a partial, masked
    # tail block), forced by a tiny block budget.
    y = jax.random.normal(k2, (4, 40, 256), dtype=jnp.float32)
    out3 = jax.block_until_ready(
        pallas_logsumexp(y, dim=1, keepdim=False, block_budget_bytes=64 << 10))
    ref3 = jax.scipy.special.logsumexp(y, axis=1, keepdims=False)
    np.testing.assert_allclose(np.asarray(out3), np.asarray(ref3),
                               rtol=1e-5, atol=1e-5)

    # Last-axis per-lane accumulator path (K > 4096, partial tail block).
    z = jax.random.normal(k3, (8, 5000), dtype=jnp.float32)
    out4 = jax.block_until_ready(pallas_logsumexp(z, dim=-1, keepdim=False))
    ref4 = jax.scipy.special.logsumexp(z, axis=-1, keepdims=False)
    np.testing.assert_allclose(np.asarray(out4), np.asarray(ref4),
                               rtol=1e-4, atol=1e-5)

    print("KERNEL_OK")
</pallas_src>

<mosaic_0001>
module attributes {stable_mosaic.version = 11 : i64} {
  func.func @_lse_mid_single_kernel(%arg0: i32, %arg1: i32, %arg2: memref<2x4x256xf32, #tpu.memory_space<vmem>>, %arg3: memref<2x256xf32, #tpu.memory_space<vmem>>) attributes {dimension_semantics = [#tpu.dimension_semantics<parallel>, #tpu.dimension_semantics<parallel>], iteration_bounds = array<i64: 1, 1>, scalar_prefetch = 0 : i64, scratch_operands = 0 : i64, tpu.core_type = #tpu.core_type<tc>, window_params = [{transform_indices = @transform_0, window_bounds = array<i64: 2, 4, 256>}, {transform_indices = @transform_1, window_bounds = array<i64: 2, 256>}]} {
    %c0 = arith.constant 0 : index
    %c0_0 = arith.constant 0 : index
    %c0_1 = arith.constant 0 : index
    %0 = vector.load %arg2[%c0, %c0_0, %c0_1] : memref<2x4x256xf32, #tpu.memory_space<vmem>>, vector<2x4x256xf32>
    %cst = arith.constant dense<0xFF800000> : vector<2x256xf32>
    %1 = vector.multi_reduction <maximumf>, %0, %cst [1] : vector<2x4x256xf32> to vector<2x256xf32>
    %2 = vector.shape_cast %1 : vector<2x256xf32> to vector<2x1x256xf32>
    %3 = tpu.weird %2 : vector<2x1x256xf32> -> vector<2x1x256xi1>
    %cst_2 = arith.constant dense<true> : vector<2x1x256xi1>
    %4 = arith.xori %3, %cst_2 : vector<2x1x256xi1>
    %cst_3 = arith.constant 0.000000e+00 : f32
    %5 = vector.broadcast %cst_3 : f32 to vector<2x1x256xf32>
    %6 = arith.select %4, %2, %5 : vector<2x1x256xi1>, vector<2x1x256xf32>
    %7 = vector.broadcast %6 : vector<2x1x256xf32> to vector<2x4x256xf32>
    %8 = arith.subf %0, %7 : vector<2x4x256xf32>
    %9 = math.exp %8 : vector<2x4x256xf32>
    %cst_4 = arith.constant dense<0.000000e+00> : vector<2x256xf32>
    %10 = vector.multi_reduction <add>, %9, %cst_4 [1] : vector<2x4x256xf32> to vector<2x256xf32>
    %11 = math.log %10 : vector<2x256xf32>
    %12 = vector.shape_cast %6 : vector<2x1x256xf32> to vector<2x256xf32>
    %13 = arith.addf %11, %12 : vector<2x256xf32>
    %c0_5 = arith.constant 0 : index
    %c0_6 = arith.constant 0 : index
    %14 = vector.load %arg3[%c0_5, %c0_6] : memref<2x256xf32, #tpu.memory_space<vmem>>, vector<2x256xf32>
    tpu.vector_store %arg3[%c0_5, %c0_6], %13 {strides = array<i32>} : memref<2x256xf32, #tpu.memory_space<vmem>>, vector<2x256xf32>,
    return
  }
  func.func @transform_0(%arg0: i32, %arg1: i32) -> (i32, i32, i32) {
    %c0_i32 = arith.constant 0 : i32
    %c0_i32_0 = arith.constant 0 : i32
    return %arg0, %c0_i32, %arg1 : i32, i32, i32
  }
  func.func @transform_1(%arg0: i32, %arg1: i32) -> (i32, i32) {
    %c0_i32 = arith.constant 0 : i32
    return %arg0, %arg1 : i32, i32
  }
}

</mosaic_0001>

<llo_original>
// kernel: tpu_custom_call.1
$region0: #{tpu_custom_call.1}
  #allocation0 [shape = 'u32[]', space=smem, size = 0x4, offset = 0x4, fixed_abs, tag = 'smem constant byte address 0x4 - core index']
  #allocation1 [shape = 'u32[72,128]{1,0:T(1,128)}', space=vmem, size = 0x9000, scoped, tag = 'internal scratch']
  %s0 = inlined_call_operand.hbm [shape: f32[2,4,256], index: 0, kind: input, shape index: {}]
  %s1 = inlined_call_operand.hbm [shape: f32[2,256], index: 1, kind: output, shape index: {}]
  %s2 = sld [smem:[#allocation0]]
  $region18: #{tpu_custom_call.1} parent=0
    _
  %s4 = ssub.s32 1, %s2
  %s5 = scalar_select 0, %s4, %s2
  $region1: #{tpu_custom_call.1} parent=0
    #allocation2 [shape = 'u8[8192]{0}', space=vmem, size = 0x2000, scoped, tag = 'input window, operand 0, single buffered']
    #allocation3 [shape = 's32[1]{0}', space=sflag, size = 0x4, scoped, tag = 'scoped memory for tpu_custom_call.1']
    #allocation4 [shape = 's32[1]{0}', space=sflag, size = 0x4, scoped, tag = 'scoped memory for tpu_custom_call.1']
    #allocation5 [shape = 'u8[2048]{0}', space=vmem, size = 0x800, scoped, tag = 'output window, operand 0, single buffered']
    %6 = vsyncpa [#allocation3], 0
    %7 = vsyncpa [#allocation4], 0
    // Predicated region
    $region2: #{tpu_custom_call.1} parent=1 // pred_check
      _
    $region3: #{tpu_custom_call.1} parent=1 // pred_check_branch
      %9 = sbr.rel (0) target = $region5
    $region4: #{tpu_custom_call.1} parent=1 // pred_region
      %11 = vsyncadd [#allocation3], 0
      %s12 = sshll.u32 %s0, 4
      %s13 = int_to_ptr.hbm [resolvable:$true] %s12
      %s14 = sshll.u32 [#allocation2], 4
      %s15 = int_to_ptr.vmem [resolvable:$true] %s14
      %20 = dma.hbm_to_vmem [thread:$0]  %s13, 256, %s15, [#allocation3], 128, 128, 8
    $region5: #{tpu_custom_call.1} parent=1 // pred_fallthru
      _
    // Predicated region
    $region6: #{tpu_custom_call.1} parent=1 // pred_check
      _
    $region7: #{tpu_custom_call.1} parent=1 // pred_check_branch
      %22 = sbr.rel (0) target = $region9
    $region8: #{tpu_custom_call.1} parent=1 // pred_region
      %24 = dma.done [#allocation3], 256
    $region9: #{tpu_custom_call.1} parent=1 // pred_fallthru
      _
    %v25 = vld [vmem:[#allocation2] sm:$0xff]
    %v26 = vld [vmem:[#allocation2 + $0x8] sm:$0xff]
    %29 = vst [vmem:[#allocation1] ss:$2 sm:$0xff] %v25
    %v30 = vld.sshfl [vmem:[#allocation1] sm:$0xff pattern:$0x75316420]
    %v31 = vld.sshfl [vmem:[#allocation1 + $0x8] sm:$0xff pattern:$0x75316420]
    %s32 = scalar_lea.vmem [#allocation1], 16
    %33 = vst [vmem:[%s32] ss:$2 sm:$0xff] %v26
    %v34 = vld.sshfl [vmem:[#allocation1 + $0x10] sm:$0xff pattern:$0x75316420]
    %v35 = vld.sshfl [vmem:[#allocation1 + $0x18] sm:$0xff pattern:$0x75316420]
    %vm40 = vcmask 1043456
    %v41 = vsel %vm40, %v30, -inf
    %v42 = vrot.slane %v41, 4
    %v43 = vmax.f32 %v41, %v42
    %v44 = vrot.slane %v43, 2
    %v45 = vmax.f32 %v43, %v44
    %v46 = vrot.slane %v45, 1
    %v47 = vmax.f32 %v45, %v46
    %v48 = vsel %vm40, %v31, -inf
    %v49 = vrot.slane %v48, 4
    %v50 = vmax.f32 %v48, %v49
    %v51 = vrot.slane %v50, 2
    %v52 = vmax.f32 %v50, %v51
    %v53 = vrot.slane %v52, 1
    %v54 = vmax.f32 %v52, %v53
    %v55 = vsel %vm40, %v34, -inf
    %v56 = vrot.slane %v55, 4
    %v57 = vmax.f32 %v55, %v56
    %v58 = vrot.slane %v57, 2
    %v59 = vmax.f32 %v57, %v58
    %v60 = vrot.slane %v59, 1
    %v61 = vmax.f32 %v59, %v60
    %v62 = vsel %vm40, %v35, -inf
    %v63 = vrot.slane %v62, 4
    %v64 = vmax.f32 %v62, %v63
    %v65 = vrot.slane %v64, 2
    %v66 = vmax.f32 %v64, %v65
    %v67 = vrot.slane %v66, 1
    %v68 = vmax.f32 %v66, %v67
    %vm69 = vweird.f32 %v47
    %vm70 = vweird.f32 %v54
    %vm71 = vweird.f32 %v61
    %vm72 = vweird.f32 %v68
    %vm73 = vmxor %vm69, 1
    %vm74 = vmxor %vm70, 1
    %vm75 = vmxor %vm71, 1
    %vm76 = vmxor %vm72, 1
    %v77 = vsel %vm73, %v47, 0.0
    %v78 = vsel %vm74, %v54, 0.0
    %v79 = vsel %vm75, %v61, 0.0
    %v80 = vsel %vm76, %v68, 0.0
    %v85 = vrot.slane %v78, 4
    %v86 = vrot.slane %v80, 4
    %v87 = vsel %vm40, %v77, %v85
    %v88 = vsel %vm40, %v79, %v86
    %v91 = vsub.f32 %v25, %v87
    %v92 = vsub.f32 %v26, %v88
    %v93 = vmul.f32 %v91, 1.442695
    %v94 = vpow.pop %v93
    %v95 = vmul.f32 %v92, 1.442695
    %v96 = vpow.pop %v95
    %99 = vst [vmem:[#allocation1] ss:$2 sm:$0xff] %v94
    %v100 = vld.sshfl [vmem:[#allocation1] sm:$0xff pattern:$0x75316420]
    %v101 = vld.sshfl [vmem:[#allocation1 + $0x8] sm:$0xff pattern:$0x75316420]
    %s102 = scalar_lea.vmem [#allocation1], 16
    %103 = vst [vmem:[%s102] ss:$2 sm:$0xff] %v96
    %v104 = vld.sshfl [vmem:[#allocation1 + $0x10] sm:$0xff pattern:$0x75316420]
    %v105 = vld.sshfl [vmem:[#allocation1 + $0x18] sm:$0xff pattern:$0x75316420]
    %v110 = vsel %vm40, %v100, 0.0
    %v111 = vrot.slane %v110, 4
    %v112 = vadd.f32 %v110, %v111
    %v113 = vrot.slane %v112, 2
    %v114 = vadd.f32 %v112, %v113
    %v115 = vrot.slane %v114, 1
    %v116 = vadd.f32 %v114, %v115
    %v117 = vsel %vm40, %v101, 0.0
    %v118 = vrot.slane %v117, 4
    %v119 = vadd.f32 %v117, %v118
    %v120 = vrot.slane %v119, 2
    %v121 = vadd.f32 %v119, %v120
    %v122 = vrot.slane %v121, 1
    %v123 = vadd.f32 %v121, %v122
    %v124 = vsel %vm40, %v104, 0.0
    %v125 = vrot.slane %v124, 4
    %v126 = vadd.f32 %v124, %v125
    %v127 = vrot.slane %v126, 2
    %v128 = vadd.f32 %v126, %v127
    %v129 = vrot.slane %v128, 1
    %v130 = vadd.f32 %v128, %v129
    %v131 = vsel %vm40, %v105, 0.0
    %v132 = vrot.slane %v131, 4
    %v133 = vadd.f32 %v131, %v132
    %v134 = vrot.slane %v133, 2
    %v135 = vadd.f32 %v133, %v134
    %v136 = vrot.slane %v135, 1
    %v137 = vadd.f32 %v135, %v136
    %v138 = vlog2.pop %v116
    %v139 = vmul.f32 %v138, 0.6931472
    %v140 = vlog2.pop %v123
    %v141 = vmul.f32 %v140, 0.6931472
    %v142 = vlog2.pop %v130
    %v143 = vmul.f32 %v142, 0.6931472
    %v144 = vlog2.pop %v137
    %v145 = vmul.f32 %v144, 0.6931472
    %v146 = vadd.f32 %v139, %v77
    %v147 = vadd.f32 %v141, %v78
    %v148 = vadd.f32 %v143, %v79
    %v149 = vadd.f32 %v145, %v80
    %v154 = vrot.slane %v147, 6
    %v155 = vrot.slane %v149, 6
    %vm156 = vcmask 1041408
    %v157 = vsel %vm156, %v146, %v154
    %v158 = vsel %vm156, %v148, %v155
    %vm159 = vcmask 1044484
    %v160 = vsel %vm159, %v157, %v157
    %vm161 = vcmask 1046534
    %v162 = vsel %vm161, %v157, %v160
    %v163 = vrot.slane %v158, 7
    %vm164 = vcmask 1041409
    %v165 = vsel %vm164, %v163, %v162
    %vm166 = vcmask 1043459
    %v167 = vsel %vm166, %v163, %v165
    %vm168 = vcmask 1045509
    %v169 = vsel %vm168, %v163, %v167
    %vm170 = vcmask 1047559
    %v171 = vsel %vm170, %v163, %v169
    %173 = vst [vmem:[#allocation5] sm:$0xf] %v171
    // Predicated region
    $region10: #{tpu_custom_call.1} parent=1 // pred_check
      _
    $region11: #{tpu_custom_call.1} parent=1 // pred_check_branch
      %175 = sbr.rel (0) target = $region13
    $region12: #{tpu_custom_call.1} parent=1 // pred_region
      %177 = vsyncadd [#allocation4], 0
      %s179 = sshll.u32 [#allocation5], 4
      %s180 = int_to_ptr.vmem [resolvable:$true] %s179
      %s181 = sshll.u32 %s1, 4
      %s182 = int_to_ptr.hbm [resolvable:$true] %s181
      %184 = dma.vmem_to_hbm [thread:$0]  %s180, 64, %s182, [#allocation4]
    $region13: #{tpu_custom_call.1} parent=1 // pred_fallthru
      _
    // Predicated region
    $region14: #{tpu_custom_call.1} parent=1 // pred_check
      _
    $region15: #{tpu_custom_call.1} parent=1 // pred_check_branch
      %186 = sbr.rel (0) target = $region17
    $region16: #{tpu_custom_call.1} parent=1 // pred_region
      %188 = dma.done [#allocation4], 64
    $region17: #{tpu_custom_call.1} parent=1 // pred_fallthru
      _
    %189 = vsyncpa [#allocation3], 1
    %190 = vsyncpa [#allocation4], 1

</llo_original>
